<compile_context>
chip_gen: v7x
topology: tpu7x:2x2x1
jax: 0.10.0
libtpu: 0.0.40
codegen_flags: <defaults>
</compile_context>

<pallas_src>
import numpy as np
import jax
import jax.numpy as jnp
from jax.experimental import pallas as pl
from jax.experimental.pallas import tpu as pltpu

C_IN, C_OUT, K, STRIDE = 3, 5, 3, 2
CLAMP_MIN, CLAMP_MAX = 0.05, 0.08
NPLANE = STRIDE * STRIDE        # 4 parity planes for stride 2
R = C_OUT * NPLANE              # 20 accumulator rows per image: (out channel, parity plane)
TAPS = C_IN * NPLANE            # 12 polyphase tap columns: (in channel, shift)


def _round_up(v, m):
    return (v + m - 1) // m * m


def _build_weight_matrix(w_t, bias):
    """(C_IN, C_OUT, K, K) weight + (C_OUT,) bias -> dense (R, TAPS + 1) tap matrix.

    Entry [o*4 + ph*2 + pw, c*4 + dh*2 + dw] = w_t[c, o, ph + 2 - 2*dh, pw + 2 - 2*dw]
    (zero when that kernel tap does not exist, i.e. the index equals 3).
    The last column holds the per-row bias (bias[o] repeated over the 4 planes).
    """
    wpad = jnp.pad(w_t.astype(jnp.float32), ((0, 0), (0, 0), (0, 1), (0, 1)))  # index 3 -> 0.0
    o_idx = np.repeat(np.arange(C_OUT), NPLANE)              # (R,)
    ph_idx = np.tile(np.repeat(np.arange(2), 2), C_OUT)      # (R,)
    pw_idx = np.tile(np.arange(2), 2 * C_OUT)                # (R,)
    c_idx = np.repeat(np.arange(C_IN), NPLANE)               # (TAPS,)
    dh_idx = np.tile(np.repeat(np.arange(2), 2), C_IN)       # (TAPS,)
    dw_idx = np.tile(np.arange(2), 2 * C_IN)                 # (TAPS,)
    kh = ph_idx[:, None] + 2 - 2 * dh_idx[None, :]           # (R, TAPS)
    kw = pw_idx[:, None] + 2 - 2 * dw_idx[None, :]           # (R, TAPS)
    wm = wpad[c_idx[None, :], o_idx[:, None], kh, kw]        # (R, TAPS)
    bcol = jnp.repeat(bias.astype(jnp.float32), NPLANE)[:, None]   # (R, 1)
    return jnp.concatenate([wm, bcol], axis=1)               # (R, TAPS + 1)


@jax.jit
def conv_transpose2d_clamp(x, w_t, bias):
    """clamp(ConvTranspose2d(3,5,3,stride=2)(x), 0.05, 0.08); x: (B, 3, H, W) NCHW."""
    B, cin, H, W = x.shape
    assert cin == C_IN

    WP = W + 2                                   # row pitch of the padded, flattened input
    L_ACC = _round_up((H + 1) * WP, 128)         # covers plane positions m*WP + n (m<=H, n<=W)

    # Single pad: 1-pixel conv halo plus enough extra zero rows at the bottom so the flattened
    # plane is at least L_ACC long (positions >= (H+1)*WP must read zeros).
    need = L_ACC - (H + 2) * WP
    extra = 0 if need <= 0 else -(-need // WP)
    FLAT_IN = (H + 2 + extra) * WP
    xp = jnp.pad(x.astype(jnp.float32), ((0, 0), (0, 0), (1, 1 + extra), (1, 1)))

    # Fold 2 images per grid step when possible: 2*R = 40 rows fill the sublane tiles exactly
    # and halve the number of grid steps (B=2 -> one step; B>=4 keeps grid>=2 for v7x's 2 TCs).
    IMGS = 2 if B % 2 == 0 else 1
    G = B // IMGS
    xf = xp.reshape(G, IMGS * C_IN, FLAT_IN)

    wmat = _build_weight_matrix(w_t, bias)       # (R, TAPS + 1): taps + bias column
    offs = (0, 1, WP, WP + 1)                    # flat offset of polyphase shift (dh, dw)

    def kernel(w_ref, x_ref, o_ref):
        # Bias broadcast hoisted once (reused as the accumulator init for every image).
        bias_b = jnp.broadcast_to(w_ref[:, TAPS:TAPS + 1], (R, L_ACC))
        # One aligned load of all channel rows of the folded images.
        x_all = x_ref[0, :, 0:L_ACC]                                  # (IMGS*C_IN, L_ACC)
        # The 3 nonzero shifts as lane rotations (roll by L_ACC - off == roll by -off);
        # wrapped-in lanes are the all-zero top pad row, so they contribute nothing.
        xs = [x_all] + [pltpu.roll(x_all, L_ACC - off, axis=1) for off in offs[1:]]
        outs = []
        for i in range(IMGS):
            acc = bias_b
            for c in range(C_IN):
                for s in range(NPLANE):
                    col = c * NPLANE + s
                    wcol = w_ref[:, col:col + 1]                      # (R, 1) taps, lane slice
                    row = i * C_IN + c
                    acc = acc + wcol * xs[s][row:row + 1, :]          # (R, L_ACC) VPU MAC
            outs.append(acc)
        y = outs[0] if IMGS == 1 else jnp.concatenate(outs, axis=0)   # (IMGS*R, L_ACC)
        o_ref[0] = jnp.minimum(jnp.maximum(y, CLAMP_MIN), CLAMP_MAX)

    out = pl.pallas_call(
        kernel,
        out_shape=jax.ShapeDtypeStruct((G, IMGS * R, L_ACC), jnp.float32),
        grid=(G,),
        in_specs=[
            pl.BlockSpec((R, TAPS + 1), lambda g: (0, 0)),                  # taps+bias (invariant)
            pl.BlockSpec((1, IMGS * C_IN, FLAT_IN), lambda g: (g, 0, 0)),   # IMGS images per step
        ],
        out_specs=pl.BlockSpec((1, IMGS * R, L_ACC), lambda g: (g, 0, 0)),
        compiler_params=pltpu.CompilerParams(dimension_semantics=("parallel",)),
    )(wmat, xf)

    # De-interleave the 4 parity planes back into the full image and crop (NCHW layout glue).
    Ho, Wo = STRIDE * (H - 1) + K, STRIDE * (W - 1) + K
    planes = out[:, :, :(H + 1) * WP].reshape(B, C_OUT, 2, 2, H + 1, WP)[..., :W + 1]
    y = planes.transpose(0, 1, 4, 2, 5, 3).reshape(B, C_OUT, 2 * (H + 1), 2 * (W + 1))
    return y[:, :, :Ho, :Wo]


def reference(x, w_t, bias):
    # Pure-JAX reference: conv transpose == conv_general_dilated with lhs_dilation.
    w_conv = jnp.flip(jnp.transpose(w_t, (1, 0, 2, 3)), axis=(2, 3))
    y = jax.lax.conv_general_dilated(
        x, w_conv,
        window_strides=(1, 1),
        padding=[(K - 1, K - 1), (K - 1, K - 1)],
        lhs_dilation=(STRIDE, STRIDE),
        dimension_numbers=("NCHW", "OIHW", "NCHW"),
    ) + bias.reshape(1, -1, 1, 1)
    return jnp.minimum(jnp.maximum(y, CLAMP_MIN), CLAMP_MAX)


if __name__ == "__main__":
    key = jax.random.PRNGKey(0)
    kx, kw, kb = jax.random.split(key, 3)

    B, H, W = 2, 16, 16     # small shapes consistent with the module (NCHW, 3 input channels)
    x = jax.random.normal(kx, (B, C_IN, H, W), dtype=jnp.float32)

    fan = C_OUT * K * K
    bound = 1.0 / float(np.sqrt(fan))
    w_t = jax.random.uniform(kw, (C_IN, C_OUT, K, K), minval=-bound, maxval=bound, dtype=jnp.float32)
    bias = jax.random.uniform(kb, (C_OUT,), minval=-bound, maxval=bound, dtype=jnp.float32)

    out = jax.block_until_ready(conv_transpose2d_clamp(x, w_t, bias))
    ref = jax.block_until_ready(reference(x, w_t, bias))

    assert out.shape == (B, C_OUT, (H - 1) * STRIDE + K, (W - 1) * STRIDE + K), out.shape
    max_err = float(jnp.max(jnp.abs(out - ref)))
    assert max_err < 1e-4, max_err

    print("KERNEL_OK")
</pallas_src>

<mosaic_0001>
module attributes {stable_mosaic.version = 11 : i64} {
  func.func @kernel(%arg0: i32, %arg1: memref<20x13xf32, #tpu.memory_space<vmem>>, %arg2: memref<1x6x396xf32, #tpu.memory_space<vmem>>, %arg3: memref<1x40x384xf32, #tpu.memory_space<vmem>>) attributes {dimension_semantics = [#tpu.dimension_semantics<parallel>], iteration_bounds = array<i64: 1>, scalar_prefetch = 0 : i64, scratch_operands = 0 : i64, tpu.core_type = #tpu.core_type<tc>, window_params = [{pipeline_mode = #tpu.pipeline_mode<synchronous>, transform_indices = @transform_0, window_bounds = array<i64: 20, 13>}, {transform_indices = @transform_1, window_bounds = array<i64: 1, 6, 396>}, {transform_indices = @transform_2, window_bounds = array<i64: 1, 40, 384>}]} {
    %c0 = arith.constant 0 : index
    %c12 = arith.constant 12 : index
    %0 = vector.load %arg1[%c0, %c12] : memref<20x13xf32, #tpu.memory_space<vmem>>, vector<20x1xf32>
    %1 = vector.shape_cast %0 : vector<20x1xf32> to vector<20x1xf32>
    %2 = vector.broadcast %1 : vector<20x1xf32> to vector<20x384xf32>
    %c0_0 = arith.constant 0 : index
    %c0_1 = arith.constant 0 : index
    %c0_2 = arith.constant 0 : index
    %3 = vector.load %arg2[%c0_0, %c0_1, %c0_2] : memref<1x6x396xf32, #tpu.memory_space<vmem>>, vector<1x6x384xf32>
    %4 = vector.shape_cast %3 : vector<1x6x384xf32> to vector<6x384xf32>
    %c383_i32 = arith.constant 383 : i32
    %5 = tpu.dynamic_rotate %4 by %c383_i32 dim 1 : vector<6x384xf32>, i32 -> vector<6x384xf32>
    %c366_i32 = arith.constant 366 : i32
    %6 = tpu.dynamic_rotate %4 by %c366_i32 dim 1 : vector<6x384xf32>, i32 -> vector<6x384xf32>
    %c365_i32 = arith.constant 365 : i32
    %7 = tpu.dynamic_rotate %4 by %c365_i32 dim 1 : vector<6x384xf32>, i32 -> vector<6x384xf32>
    %c0_3 = arith.constant 0 : index
    %c0_4 = arith.constant 0 : index
    %8 = vector.load %arg1[%c0_3, %c0_4] : memref<20x13xf32, #tpu.memory_space<vmem>>, vector<20x1xf32>
    %9 = vector.extract_strided_slice %4 {offsets = [0, 0], sizes = [1, 384], strides = [1, 1]} : vector<6x384xf32> to vector<1x384xf32>
    %10 = vector.broadcast %8 : vector<20x1xf32> to vector<20x384xf32>
    %11 = vector.broadcast %9 : vector<1x384xf32> to vector<20x384xf32>
    %12 = arith.mulf %10, %11 : vector<20x384xf32>
    %13 = arith.addf %2, %12 : vector<20x384xf32>
    %c0_5 = arith.constant 0 : index
    %c1 = arith.constant 1 : index
    %14 = vector.load %arg1[%c0_5, %c1] : memref<20x13xf32, #tpu.memory_space<vmem>>, vector<20x1xf32>
    %15 = vector.extract_strided_slice %5 {offsets = [0, 0], sizes = [1, 384], strides = [1, 1]} : vector<6x384xf32> to vector<1x384xf32>
    %16 = vector.broadcast %14 : vector<20x1xf32> to vector<20x384xf32>
    %17 = vector.broadcast %15 : vector<1x384xf32> to vector<20x384xf32>
    %18 = arith.mulf %16, %17 : vector<20x384xf32>
    %19 = arith.addf %13, %18 : vector<20x384xf32>
    %c0_6 = arith.constant 0 : index
    %c2 = arith.constant 2 : index
    %20 = vector.load %arg1[%c0_6, %c2] : memref<20x13xf32, #tpu.memory_space<vmem>>, vector<20x1xf32>
    %21 = vector.extract_strided_slice %6 {offsets = [0, 0], sizes = [1, 384], strides = [1, 1]} : vector<6x384xf32> to vector<1x384xf32>
    %22 = vector.broadcast %20 : vector<20x1xf32> to vector<20x384xf32>
    %23 = vector.broadcast %21 : vector<1x384xf32> to vector<20x384xf32>
    %24 = arith.mulf %22, %23 : vector<20x384xf32>
    %25 = arith.addf %19, %24 : vector<20x384xf32>
    %c0_7 = arith.constant 0 : index
    %c3 = arith.constant 3 : index
    %26 = vector.load %arg1[%c0_7, %c3] : memref<20x13xf32, #tpu.memory_space<vmem>>, vector<20x1xf32>
    %27 = vector.extract_strided_slice %7 {offsets = [0, 0], sizes = [1, 384], strides = [1, 1]} : vector<6x384xf32> to vector<1x384xf32>
    %28 = vector.broadcast %26 : vector<20x1xf32> to vector<20x384xf32>
    %29 = vector.broadcast %27 : vector<1x384xf32> to vector<20x384xf32>
    %30 = arith.mulf %28, %29 : vector<20x384xf32>
    %31 = arith.addf %25, %30 : vector<20x384xf32>
    %c0_8 = arith.constant 0 : index
    %c4 = arith.constant 4 : index
    %32 = vector.load %arg1[%c0_8, %c4] : memref<20x13xf32, #tpu.memory_space<vmem>>, vector<20x1xf32>
    %33 = vector.extract_strided_slice %4 {offsets = [1, 0], sizes = [1, 384], strides = [1, 1]} : vector<6x384xf32> to vector<1x384xf32>
    %34 = vector.broadcast %32 : vector<20x1xf32> to vector<20x384xf32>
    %35 = vector.broadcast %33 : vector<1x384xf32> to vector<20x384xf32>
    %36 = arith.mulf %34, %35 : vector<20x384xf32>
    %37 = arith.addf %31, %36 : vector<20x384xf32>
    %c0_9 = arith.constant 0 : index
    %c5 = arith.constant 5 : index
    %38 = vector.load %arg1[%c0_9, %c5] : memref<20x13xf32, #tpu.memory_space<vmem>>, vector<20x1xf32>
    %39 = vector.extract_strided_slice %5 {offsets = [1, 0], sizes = [1, 384], strides = [1, 1]} : vector<6x384xf32> to vector<1x384xf32>
    %40 = vector.broadcast %38 : vector<20x1xf32> to vector<20x384xf32>
    %41 = vector.broadcast %39 : vector<1x384xf32> to vector<20x384xf32>
    %42 = arith.mulf %40, %41 : vector<20x384xf32>
    %43 = arith.addf %37, %42 : vector<20x384xf32>
    %c0_10 = arith.constant 0 : index
    %c6 = arith.constant 6 : index
    %44 = vector.load %arg1[%c0_10, %c6] : memref<20x13xf32, #tpu.memory_space<vmem>>, vector<20x1xf32>
    %45 = vector.extract_strided_slice %6 {offsets = [1, 0], sizes = [1, 384], strides = [1, 1]} : vector<6x384xf32> to vector<1x384xf32>
    %46 = vector.broadcast %44 : vector<20x1xf32> to vector<20x384xf32>
    %47 = vector.broadcast %45 : vector<1x384xf32> to vector<20x384xf32>
    %48 = arith.mulf %46, %47 : vector<20x384xf32>
    %49 = arith.addf %43, %48 : vector<20x384xf32>
    %c0_11 = arith.constant 0 : index
    %c7 = arith.constant 7 : index
    %50 = vector.load %arg1[%c0_11, %c7] : memref<20x13xf32, #tpu.memory_space<vmem>>, vector<20x1xf32>
    %51 = vector.extract_strided_slice %7 {offsets = [1, 0], sizes = [1, 384], strides = [1, 1]} : vector<6x384xf32> to vector<1x384xf32>
    %52 = vector.broadcast %50 : vector<20x1xf32> to vector<20x384xf32>
    %53 = vector.broadcast %51 : vector<1x384xf32> to vector<20x384xf32>
    %54 = arith.mulf %52, %53 : vector<20x384xf32>
    %55 = arith.addf %49, %54 : vector<20x384xf32>
    %c0_12 = arith.constant 0 : index
    %c8 = arith.constant 8 : index
    %56 = vector.load %arg1[%c0_12, %c8] : memref<20x13xf32, #tpu.memory_space<vmem>>, vector<20x1xf32>
    %57 = vector.extract_strided_slice %4 {offsets = [2, 0], sizes = [1, 384], strides = [1, 1]} : vector<6x384xf32> to vector<1x384xf32>
    %58 = vector.broadcast %56 : vector<20x1xf32> to vector<20x384xf32>
    %59 = vector.broadcast %57 : vector<1x384xf32> to vector<20x384xf32>
    %60 = arith.mulf %58, %59 : vector<20x384xf32>
    %61 = arith.addf %55, %60 : vector<20x384xf32>
    %c0_13 = arith.constant 0 : index
    %c9 = arith.constant 9 : index
    %62 = vector.load %arg1[%c0_13, %c9] : memref<20x13xf32, #tpu.memory_space<vmem>>, vector<20x1xf32>
    %63 = vector.extract_strided_slice %5 {offsets = [2, 0], sizes = [1, 384], strides = [1, 1]} : vector<6x384xf32> to vector<1x384xf32>
    %64 = vector.broadcast %62 : vector<20x1xf32> to vector<20x384xf32>
    %65 = vector.broadcast %63 : vector<1x384xf32> to vector<20x384xf32>
    %66 = arith.mulf %64, %65 : vector<20x384xf32>
    %67 = arith.addf %61, %66 : vector<20x384xf32>
    %c0_14 = arith.constant 0 : index
    %c10 = arith.constant 10 : index
    %68 = vector.load %arg1[%c0_14, %c10] : memref<20x13xf32, #tpu.memory_space<vmem>>, vector<20x1xf32>
    %69 = vector.extract_strided_slice %6 {offsets = [2, 0], sizes = [1, 384], strides = [1, 1]} : vector<6x384xf32> to vector<1x384xf32>
    %70 = vector.broadcast %68 : vector<20x1xf32> to vector<20x384xf32>
    %71 = vector.broadcast %69 : vector<1x384xf32> to vector<20x384xf32>
    %72 = arith.mulf %70, %71 : vector<20x384xf32>
    %73 = arith.addf %67, %72 : vector<20x384xf32>
    %c0_15 = arith.constant 0 : index
    %c11 = arith.constant 11 : index
    %74 = vector.load %arg1[%c0_15, %c11] : memref<20x13xf32, #tpu.memory_space<vmem>>, vector<20x1xf32>
    %75 = vector.extract_strided_slice %7 {offsets = [2, 0], sizes = [1, 384], strides = [1, 1]} : vector<6x384xf32> to vector<1x384xf32>
    %76 = vector.broadcast %74 : vector<20x1xf32> to vector<20x384xf32>
    %77 = vector.broadcast %75 : vector<1x384xf32> to vector<20x384xf32>
    %78 = arith.mulf %76, %77 : vector<20x384xf32>
    %79 = arith.addf %73, %78 : vector<20x384xf32>
    %c0_16 = arith.constant 0 : index
    %c0_17 = arith.constant 0 : index
    %80 = vector.load %arg1[%c0_16, %c0_17] : memref<20x13xf32, #tpu.memory_space<vmem>>, vector<20x1xf32>
    %81 = vector.extract_strided_slice %4 {offsets = [3, 0], sizes = [1, 384], strides = [1, 1]} : vector<6x384xf32> to vector<1x384xf32>
    %82 = vector.broadcast %80 : vector<20x1xf32> to vector<20x384xf32>
    %83 = vector.broadcast %81 : vector<1x384xf32> to vector<20x384xf32>
    %84 = arith.mulf %82, %83 : vector<20x384xf32>
    %85 = arith.addf %2, %84 : vector<20x384xf32>
    %c0_18 = arith.constant 0 : index
    %c1_19 = arith.constant 1 : index
    %86 = vector.load %arg1[%c0_18, %c1_19] : memref<20x13xf32, #tpu.memory_space<vmem>>, vector<20x1xf32>
    %87 = vector.extract_strided_slice %5 {offsets = [3, 0], sizes = [1, 384], strides = [1, 1]} : vector<6x384xf32> to vector<1x384xf32>
    %88 = vector.broadcast %86 : vector<20x1xf32> to vector<20x384xf32>
    %89 = vector.broadcast %87 : vector<1x384xf32> to vector<20x384xf32>
    %90 = arith.mulf %88, %89 : vector<20x384xf32>
    %91 = arith.addf %85, %90 : vector<20x384xf32>
    %c0_20 = arith.constant 0 : index
    %c2_21 = arith.constant 2 : index
    %92 = vector.load %arg1[%c0_20, %c2_21] : memref<20x13xf32, #tpu.memory_space<vmem>>, vector<20x1xf32>
    %93 = vector.extract_strided_slice %6 {offsets = [3, 0], sizes = [1, 384], strides = [1, 1]} : vector<6x384xf32> to vector<1x384xf32>
    %94 = vector.broadcast %92 : vector<20x1xf32> to vector<20x384xf32>
    %95 = vector.broadcast %93 : vector<1x384xf32> to vector<20x384xf32>
    %96 = arith.mulf %94, %95 : vector<20x384xf32>
    %97 = arith.addf %91, %96 : vector<20x384xf32>
    %c0_22 = arith.constant 0 : index
    %c3_23 = arith.constant 3 : index
    %98 = vector.load %arg1[%c0_22, %c3_23] : memref<20x13xf32, #tpu.memory_space<vmem>>, vector<20x1xf32>
    %99 = vector.extract_strided_slice %7 {offsets = [3, 0], sizes = [1, 384], strides = [1, 1]} : vector<6x384xf32> to vector<1x384xf32>
    %100 = vector.broadcast %98 : vector<20x1xf32> to vector<20x384xf32>
    %101 = vector.broadcast %99 : vector<1x384xf32> to vector<20x384xf32>
    %102 = arith.mulf %100, %101 : vector<20x384xf32>
    %103 = arith.addf %97, %102 : vector<20x384xf32>
    %c0_24 = arith.constant 0 : index
    %c4_25 = arith.constant 4 : index
    %104 = vector.load %arg1[%c0_24, %c4_25] : memref<20x13xf32, #tpu.memory_space<vmem>>, vector<20x1xf32>
    %105 = vector.extract_strided_slice %4 {offsets = [4, 0], sizes = [1, 384], strides = [1, 1]} : vector<6x384xf32> to vector<1x384xf32>
    %106 = vector.broadcast %104 : vector<20x1xf32> to vector<20x384xf32>
    %107 = vector.broadcast %105 : vector<1x384xf32> to vector<20x384xf32>
    %108 = arith.mulf %106, %107 : vector<20x384xf32>
    %109 = arith.addf %103, %108 : vector<20x384xf32>
    %c0_26 = arith.constant 0 : index
    %c5_27 = arith.constant 5 : index
    %110 = vector.load %arg1[%c0_26, %c5_27] : memref<20x13xf32, #tpu.memory_space<vmem>>, vector<20x1xf32>
    %111 = vector.extract_strided_slice %5 {offsets = [4, 0], sizes = [1, 384], strides = [1, 1]} : vector<6x384xf32> to vector<1x384xf32>
    %112 = vector.broadcast %110 : vector<20x1xf32> to vector<20x384xf32>
    %113 = vector.broadcast %111 : vector<1x384xf32> to vector<20x384xf32>
    %114 = arith.mulf %112, %113 : vector<20x384xf32>
    %115 = arith.addf %109, %114 : vector<20x384xf32>
    %c0_28 = arith.constant 0 : index
    %c6_29 = arith.constant 6 : index
    %116 = vector.load %arg1[%c0_28, %c6_29] : memref<20x13xf32, #tpu.memory_space<vmem>>, vector<20x1xf32>
    %117 = vector.extract_strided_slice %6 {offsets = [4, 0], sizes = [1, 384], strides = [1, 1]} : vector<6x384xf32> to vector<1x384xf32>
    %118 = vector.broadcast %116 : vector<20x1xf32> to vector<20x384xf32>
    %119 = vector.broadcast %117 : vector<1x384xf32> to vector<20x384xf32>
    %120 = arith.mulf %118, %119 : vector<20x384xf32>
    %121 = arith.addf %115, %120 : vector<20x384xf32>
    %c0_30 = arith.constant 0 : index
    %c7_31 = arith.constant 7 : index
    %122 = vector.load %arg1[%c0_30, %c7_31] : memref<20x13xf32, #tpu.memory_space<vmem>>, vector<20x1xf32>
    %123 = vector.extract_strided_slice %7 {offsets = [4, 0], sizes = [1, 384], strides = [1, 1]} : vector<6x384xf32> to vector<1x384xf32>
    %124 = vector.broadcast %122 : vector<20x1xf32> to vector<20x384xf32>
    %125 = vector.broadcast %123 : vector<1x384xf32> to vector<20x384xf32>
    %126 = arith.mulf %124, %125 : vector<20x384xf32>
    %127 = arith.addf %121, %126 : vector<20x384xf32>
    %c0_32 = arith.constant 0 : index
    %c8_33 = arith.constant 8 : index
    %128 = vector.load %arg1[%c0_32, %c8_33] : memref<20x13xf32, #tpu.memory_space<vmem>>, vector<20x1xf32>
    %129 = vector.extract_strided_slice %4 {offsets = [5, 0], sizes = [1, 384], strides = [1, 1]} : vector<6x384xf32> to vector<1x384xf32>
    %130 = vector.broadcast %128 : vector<20x1xf32> to vector<20x384xf32>
    %131 = vector.broadcast %129 : vector<1x384xf32> to vector<20x384xf32>
    %132 = arith.mulf %130, %131 : vector<20x384xf32>
    %133 = arith.addf %127, %132 : vector<20x384xf32>
    %c0_34 = arith.constant 0 : index
    %c9_35 = arith.constant 9 : index
    %134 = vector.load %arg1[%c0_34, %c9_35] : memref<20x13xf32, #tpu.memory_space<vmem>>, vector<20x1xf32>
    %135 = vector.extract_strided_slice %5 {offsets = [5, 0], sizes = [1, 384], strides = [1, 1]} : vector<6x384xf32> to vector<1x384xf32>
    %136 = vector.broadcast %134 : vector<20x1xf32> to vector<20x384xf32>
    %137 = vector.broadcast %135 : vector<1x384xf32> to vector<20x384xf32>
    %138 = arith.mulf %136, %137 : vector<20x384xf32>
    %139 = arith.addf %133, %138 : vector<20x384xf32>
    %c0_36 = arith.constant 0 : index
    %c10_37 = arith.constant 10 : index
    %140 = vector.load %arg1[%c0_36, %c10_37] : memref<20x13xf32, #tpu.memory_space<vmem>>, vector<20x1xf32>
    %141 = vector.extract_strided_slice %6 {offsets = [5, 0], sizes = [1, 384], strides = [1, 1]} : vector<6x384xf32> to vector<1x384xf32>
    %142 = vector.broadcast %140 : vector<20x1xf32> to vector<20x384xf32>
    %143 = vector.broadcast %141 : vector<1x384xf32> to vector<20x384xf32>
    %144 = arith.mulf %142, %143 : vector<20x384xf32>
    %145 = arith.addf %139, %144 : vector<20x384xf32>
    %c0_38 = arith.constant 0 : index
    %c11_39 = arith.constant 11 : index
    %146 = vector.load %arg1[%c0_38, %c11_39] : memref<20x13xf32, #tpu.memory_space<vmem>>, vector<20x1xf32>
    %147 = vector.extract_strided_slice %7 {offsets = [5, 0], sizes = [1, 384], strides = [1, 1]} : vector<6x384xf32> to vector<1x384xf32>
    %148 = vector.broadcast %146 : vector<20x1xf32> to vector<20x384xf32>
    %149 = vector.broadcast %147 : vector<1x384xf32> to vector<20x384xf32>
    %150 = arith.mulf %148, %149 : vector<20x384xf32>
    %151 = arith.addf %145, %150 : vector<20x384xf32>
    %152 = tpu.concatenate %79, %151 in 0 : vector<20x384xf32>, vector<20x384xf32> -> vector<40x384xf32>
    %cst = arith.constant 5.000000e-02 : f32
    %153 = vector.broadcast %cst : f32 to vector<40x384xf32>
    %154 = arith.maximumf %152, %153 : vector<40x384xf32>
    %cst_40 = arith.constant 8.000000e-02 : f32
    %155 = vector.broadcast %cst_40 : f32 to vector<40x384xf32>
    %156 = arith.minimumf %154, %155 : vector<40x384xf32>
    %c0_41 = arith.constant 0 : index
    %c0_42 = arith.constant 0 : index
    %c0_43 = arith.constant 0 : index
    %157 = vector.load %arg3[%c0_41, %c0_42, %c0_43] : memref<1x40x384xf32, #tpu.memory_space<vmem>>, vector<1x40x384xf32>
    %158 = vector.shape_cast %157 : vector<1x40x384xf32> to vector<40x384xf32>
    %159 = vector.shape_cast %156 : vector<40x384xf32> to vector<1x40x384xf32>
    tpu.vector_store %arg3[%c0_41, %c0_42, %c0_43], %159 {strides = array<i32>} : memref<1x40x384xf32, #tpu.memory_space<vmem>>, vector<1x40x384xf32>,
    return
  }
  func.func @transform_0(%arg0: i32) -> (i32, i32) {
    %c0_i32 = arith.constant 0 : i32
    %c0_i32_0 = arith.constant 0 : i32
    %c0_i32_1 = arith.constant 0 : i32
    return %c0_i32, %c0_i32_0 : i32, i32
  }
  func.func @transform_1(%arg0: i32) -> (i32, i32, i32) {
    %c0_i32 = arith.constant 0 : i32
    %c0_i32_0 = arith.constant 0 : i32
    %c0_i32_1 = arith.constant 0 : i32
    return %arg0, %c0_i32, %c0_i32_0 : i32, i32, i32
  }
  func.func @transform_2(%arg0: i32) -> (i32, i32, i32) {
    %c0_i32 = arith.constant 0 : i32
    %c0_i32_0 = arith.constant 0 : i32
    %c0_i32_1 = arith.constant 0 : i32
    return %arg0, %c0_i32, %c0_i32_0 : i32, i32, i32
  }
}

</mosaic_0001>

<llo_original>
// kernel: conv_transpose2d_clamp.1
$region0: #{conv_transpose2d_clamp.1}
  #allocation0 [shape = 'u32[]', space=smem, size = 0x4, offset = 0x4, fixed_abs, tag = 'smem constant byte address 0x4 - core index']
  #allocation1 [shape = 'u32[144,128]{1,0:T(1,128)}', space=vmem, size = 0x12000, scoped, tag = 'internal scratch']
  %s0 = inlined_call_operand.vmem [shape: f32[20,13], index: 0, kind: input, shape index: {}]
  %s1 = inlined_call_operand.vmem [shape: f32[1,6,396], index: 1, kind: input, shape index: {}]
  %s2 = inlined_call_operand.vmem [shape: f32[1,40,384], index: 2, kind: output, shape index: {}]
  %s3 = sld [smem:[#allocation0]]
  $region18: #{conv_transpose2d_clamp.1} parent=0
    _
  %s5 = ssub.s32 1, %s3
  %s6 = scalar_select 0, %s5, %s3
  // Predicated region
  $region2: #{conv_transpose2d_clamp.1} parent=0 // pred_check
    _
  $region3: #{conv_transpose2d_clamp.1} parent=0 // pred_check_branch
    %8 = sbr.rel (0) target = $region5
  $region4: #{conv_transpose2d_clamp.1} parent=0 // pred_region
    _
  $region5: #{conv_transpose2d_clamp.1} parent=0 // pred_fallthru
    _
  // Predicated region
  $region6: #{conv_transpose2d_clamp.1} parent=0 // pred_check
    _
  $region7: #{conv_transpose2d_clamp.1} parent=0 // pred_check_branch
    %10 = sbr.rel (0) target = $region9
  $region8: #{conv_transpose2d_clamp.1} parent=0 // pred_region
    _
  $region9: #{conv_transpose2d_clamp.1} parent=0 // pred_fallthru
    _
  %v11 = vld [vmem:[%s0] sm:$0xff]
  %v12 = vld [vmem:[%s0 + $0x8] sm:$0xff]
  %v13 = vld [vmem:[%s0 + $0x10] sm:$0xf]
  %15 = vset.pattern.permute.xlu0 12
  %16 = vperm.xlu0 %15, %v11
  %v17 = vpop.permute.xlu0 %16
  %20 = vset.pattern.permute.xlu0 12
  %21 = vperm.xlu0 %20, %v12
  %v22 = vpop.permute.xlu0 %21
  %25 = vset.pattern.permute.xlu0 12
  %26 = vperm.xlu0 %25, %v13
  %v27 = vpop.permute.xlu0 %26
  %v29 = vld [vmem:[%s1] sm:$0x3f]
  %v30 = vld [vmem:[%s1 + $0x8] sm:$0x3f]
  %v31 = vld [vmem:[%s1 + $0x10] sm:$0x3f]
  %32 = vrot.lane.b32.xlu0 %v29, 127
  %v33 = vpop.permute.xlu0 %32
  %34 = vrot.lane.b32.xlu0 %v30, 127
  %v35 = vpop.permute.xlu0 %34
  %36 = vrot.lane.b32.xlu0 %v31, 127
  %v37 = vpop.permute.xlu0 %36
  %v38 = vlaneseq
  %v39 = vand.u32 %v38, 127
  %vm40 = vcmp.lt.s32.totalorder %v39, 127
  %v41 = vsel %vm40, %v35, %v37
  %v42 = vsel %vm40, %v33, %v35
  %v43 = vsel %vm40, %v37, %v33
  %44 = vrot.lane.b32.xlu0 %v29, 110
  %v45 = vpop.permute.xlu0 %44
  %46 = vrot.lane.b32.xlu0 %v30, 110
  %v47 = vpop.permute.xlu0 %46
  %48 = vrot.lane.b32.xlu0 %v31, 110
  %v49 = vpop.permute.xlu0 %48
  %vm50 = vcmp.lt.s32.totalorder %v39, 110
  %v51 = vsel %vm50, %v47, %v49
  %v52 = vsel %vm50, %v45, %v47
  %v53 = vsel %vm50, %v49, %v45
  %54 = vrot.lane.b32.xlu0 %v29, 109
  %v55 = vpop.permute.xlu0 %54
  %56 = vrot.lane.b32.xlu0 %v30, 109
  %v57 = vpop.permute.xlu0 %56
  %58 = vrot.lane.b32.xlu0 %v31, 109
  %v59 = vpop.permute.xlu0 %58
  %vm60 = vcmp.lt.s32.totalorder %v39, 109
  %v61 = vsel %vm60, %v57, %v59
  %v62 = vsel %vm60, %v55, %v57
  %v63 = vsel %vm60, %v59, %v55
  %64 = vset.pattern.permute.xlu0 0
  %65 = vperm.xlu0 %64, %v11
  %v66 = vpop.permute.xlu0 %65
  %68 = vset.pattern.permute.xlu0 0
  %69 = vperm.xlu0 %68, %v12
  %v70 = vpop.permute.xlu0 %69
  %72 = vset.pattern.permute.xlu0 0
  %73 = vperm.xlu0 %72, %v13
  %v74 = vpop.permute.xlu0 %73
  %v76 = vlaneseq
  %v77 = vshrl.u32 %v76, 7
  %v78 = vsub.s32 0, %v77
  %v79 = vrot.slane %v29, %v78
  %v80 = vlaneseq
  %v81 = vshrl.u32 %v80, 7
  %v82 = vsub.s32 0, %v81
  %v83 = vrot.slane %v30, %v82
  %v84 = vlaneseq
  %v85 = vshrl.u32 %v84, 7
  %v86 = vsub.s32 0, %v85
  %v87 = vrot.slane %v31, %v86
  %v88 = vmul.f32 %v66, %v79
  %v89 = vmul.f32 %v66, %v83
  %v90 = vmul.f32 %v66, %v87
  %v91 = vmul.f32 %v70, %v79
  %v92 = vmul.f32 %v70, %v83
  %v93 = vmul.f32 %v70, %v87
  %v94 = vmul.f32 %v74, %v79
  %v95 = vmul.f32 %v74, %v83
  %v96 = vmul.f32 %v74, %v87
  %v97 = vadd.f32 %v17, %v88
  %v98 = vadd.f32 %v17, %v89
  %v99 = vadd.f32 %v17, %v90
  %v100 = vadd.f32 %v22, %v91
  %v101 = vadd.f32 %v22, %v92
  %v102 = vadd.f32 %v22, %v93
  %v103 = vadd.f32 %v27, %v94
  %v104 = vadd.f32 %v27, %v95
  %v105 = vadd.f32 %v27, %v96
  %106 = vset.pattern.permute.xlu0 1
  %107 = vperm.xlu0 %106, %v11
  %v108 = vpop.permute.xlu0 %107
  %110 = vset.pattern.permute.xlu0 1
  %111 = vperm.xlu0 %110, %v12
  %v112 = vpop.permute.xlu0 %111
  %114 = vset.pattern.permute.xlu0 1
  %115 = vperm.xlu0 %114, %v13
  %v116 = vpop.permute.xlu0 %115
  %v118 = vlaneseq
  %v119 = vshrl.u32 %v118, 7
  %v120 = vsub.s32 0, %v119
  %v121 = vrot.slane %v42, %v120
  %v122 = vlaneseq
  %v123 = vshrl.u32 %v122, 7
  %v124 = vsub.s32 0, %v123
  %v125 = vrot.slane %v41, %v124
  %v126 = vlaneseq
  %v127 = vshrl.u32 %v126, 7
  %v128 = vsub.s32 0, %v127
  %v129 = vrot.slane %v43, %v128
  %v130 = vmul.f32 %v108, %v121
  %v131 = vmul.f32 %v108, %v125
  %v132 = vmul.f32 %v108, %v129
  %v133 = vmul.f32 %v112, %v121
  %v134 = vmul.f32 %v112, %v125
  %v135 = vmul.f32 %v112, %v129
  %v136 = vmul.f32 %v116, %v121
  %v137 = vmul.f32 %v116, %v125
  %v138 = vmul.f32 %v116, %v129
  %v139 = vadd.f32 %v97, %v130
  %v140 = vadd.f32 %v98, %v131
  %v141 = vadd.f32 %v99, %v132
  %v142 = vadd.f32 %v100, %v133
  %v143 = vadd.f32 %v101, %v134
  %v144 = vadd.f32 %v102, %v135
  %v145 = vadd.f32 %v103, %v136
  %v146 = vadd.f32 %v104, %v137
  %v147 = vadd.f32 %v105, %v138
  %148 = vset.pattern.permute.xlu0 2
  %149 = vperm.xlu0 %148, %v11
  %v150 = vpop.permute.xlu0 %149
  %152 = vset.pattern.permute.xlu0 2
  %153 = vperm.xlu0 %152, %v12
  %v154 = vpop.permute.xlu0 %153
  %156 = vset.pattern.permute.xlu0 2
  %157 = vperm.xlu0 %156, %v13
  %v158 = vpop.permute.xlu0 %157
  %v160 = vlaneseq
  %v161 = vshrl.u32 %v160, 7
  %v162 = vsub.s32 0, %v161
  %v163 = vrot.slane %v52, %v162
  %v164 = vlaneseq
  %v165 = vshrl.u32 %v164, 7
  %v166 = vsub.s32 0, %v165
  %v167 = vrot.slane %v51, %v166
  %v168 = vlaneseq
  %v169 = vshrl.u32 %v168, 7
  %v170 = vsub.s32 0, %v169
  %v171 = vrot.slane %v53, %v170
  %v172 = vmul.f32 %v150, %v163
  %v173 = vmul.f32 %v150, %v167
  %v174 = vmul.f32 %v150, %v171
  %v175 = vmul.f32 %v154, %v163
  %v176 = vmul.f32 %v154, %v167
  %v177 = vmul.f32 %v154, %v171
  %v178 = vmul.f32 %v158, %v163
  %v179 = vmul.f32 %v158, %v167
  %v180 = vmul.f32 %v158, %v171
  %v181 = vadd.f32 %v139, %v172
  %v182 = vadd.f32 %v140, %v173
  %v183 = vadd.f32 %v141, %v174
  %v184 = vadd.f32 %v142, %v175
  %v185 = vadd.f32 %v143, %v176
  %v186 = vadd.f32 %v144, %v177
  %v187 = vadd.f32 %v145, %v178
  %v188 = vadd.f32 %v146, %v179
  %v189 = vadd.f32 %v147, %v180
  %190 = vset.pattern.permute.xlu0 3
  %191 = vperm.xlu0 %190, %v11
  %v192 = vpop.permute.xlu0 %191
  %194 = vset.pattern.permute.xlu0 3
  %195 = vperm.xlu0 %194, %v12
  %v196 = vpop.permute.xlu0 %195
  %198 = vset.pattern.permute.xlu0 3
  %199 = vperm.xlu0 %198, %v13
  %v200 = vpop.permute.xlu0 %199
  %v202 = vlaneseq
  %v203 = vshrl.u32 %v202, 7
  %v204 = vsub.s32 0, %v203
  %v205 = vrot.slane %v62, %v204
  %v206 = vlaneseq
  %v207 = vshrl.u32 %v206, 7
  %v208 = vsub.s32 0, %v207
  %v209 = vrot.slane %v61, %v208
  %v210 = vlaneseq
  %v211 = vshrl.u32 %v210, 7
  %v212 = vsub.s32 0, %v211
  %v213 = vrot.slane %v63, %v212
  %v214 = vmul.f32 %v192, %v205
  %v215 = vmul.f32 %v192, %v209
  %v216 = vmul.f32 %v192, %v213
  %v217 = vmul.f32 %v196, %v205
  %v218 = vmul.f32 %v196, %v209
  %v219 = vmul.f32 %v196, %v213
  %v220 = vmul.f32 %v200, %v205
  %v221 = vmul.f32 %v200, %v209
  %v222 = vmul.f32 %v200, %v213
  %v223 = vadd.f32 %v181, %v214
  %v224 = vadd.f32 %v182, %v215
  %v225 = vadd.f32 %v183, %v216
  %v226 = vadd.f32 %v184, %v217
  %v227 = vadd.f32 %v185, %v218
  %v228 = vadd.f32 %v186, %v219
  %v229 = vadd.f32 %v187, %v220
  %v230 = vadd.f32 %v188, %v221
  %v231 = vadd.f32 %v189, %v222
  %232 = vset.pattern.permute.xlu0 4
  %233 = vperm.xlu0 %232, %v11
  %v234 = vpop.permute.xlu0 %233
  %236 = vset.pattern.permute.xlu0 4
  %237 = vperm.xlu0 %236, %v12
  %v238 = vpop.permute.xlu0 %237
  %240 = vset.pattern.permute.xlu0 4
  %241 = vperm.xlu0 %240, %v13
  %v242 = vpop.permute.xlu0 %241
  %v244 = vlaneseq
  %v245 = vshrl.u32 %v244, 7
  %v246 = vsub.s32 1, %v245
  %v247 = vrot.slane %v29, %v246
  %v248 = vlaneseq
  %v249 = vshrl.u32 %v248, 7
  %v250 = vsub.s32 1, %v249
  %v251 = vrot.slane %v30, %v250
  %v252 = vlaneseq
  %v253 = vshrl.u32 %v252, 7
  %v254 = vsub.s32 1, %v253
  %v255 = vrot.slane %v31, %v254
  %v256 = vmul.f32 %v234, %v247
  %v257 = vmul.f32 %v234, %v251
  %v258 = vmul.f32 %v234, %v255
  %v259 = vmul.f32 %v238, %v247
  %v260 = vmul.f32 %v238, %v251
  %v261 = vmul.f32 %v238, %v255
  %v262 = vmul.f32 %v242, %v247
  %v263 = vmul.f32 %v242, %v251
  %v264 = vmul.f32 %v242, %v255
  %v265 = vadd.f32 %v223, %v256
  %v266 = vadd.f32 %v224, %v257
  %v267 = vadd.f32 %v225, %v258
  %v268 = vadd.f32 %v226, %v259
  %v269 = vadd.f32 %v227, %v260
  %v270 = vadd.f32 %v228, %v261
  %v271 = vadd.f32 %v229, %v262
  %v272 = vadd.f32 %v230, %v263
  %v273 = vadd.f32 %v231, %v264
  %274 = vset.pattern.permute.xlu0 5
  %275 = vperm.xlu0 %274, %v11
  %v276 = vpop.permute.xlu0 %275
  %278 = vset.pattern.permute.xlu0 5
  %279 = vperm.xlu0 %278, %v12
  %v280 = vpop.permute.xlu0 %279
  %282 = vset.pattern.permute.xlu0 5
  %283 = vperm.xlu0 %282, %v13
  %v284 = vpop.permute.xlu0 %283
  %v286 = vlaneseq
  %v287 = vshrl.u32 %v286, 7
  %v288 = vsub.s32 1, %v287
  %v289 = vrot.slane %v42, %v288
  %v290 = vlaneseq
  %v291 = vshrl.u32 %v290, 7
  %v292 = vsub.s32 1, %v291
  %v293 = vrot.slane %v41, %v292
  %v294 = vlaneseq
  %v295 = vshrl.u32 %v294, 7
  %v296 = vsub.s32 1, %v295
  %v297 = vrot.slane %v43, %v296
  %v298 = vmul.f32 %v276, %v289
  %v299 = vmul.f32 %v276, %v293
  %v300 = vmul.f32 %v276, %v297
  %v301 = vmul.f32 %v280, %v289
  %v302 = vmul.f32 %v280, %v293
  %v303 = vmul.f32 %v280, %v297
  %v304 = vmul.f32 %v284, %v289
  %v305 = vmul.f32 %v284, %v293
  %v306 = vmul.f32 %v284, %v297
  %v307 = vadd.f32 %v265, %v298
  %v308 = vadd.f32 %v266, %v299
  %v309 = vadd.f32 %v267, %v300
  %v310 = vadd.f32 %v268, %v301
  %v311 = vadd.f32 %v269, %v302
  %v312 = vadd.f32 %v270, %v303
  %v313 = vadd.f32 %v271, %v304
  %v314 = vadd.f32 %v272, %v305
  %v315 = vadd.f32 %v273, %v306
  %316 = vset.pattern.permute.xlu0 6
  %317 = vperm.xlu0 %316, %v11
  %v318 = vpop.permute.xlu0 %317
  %320 = vset.pattern.permute.xlu0 6
  %321 = vperm.xlu0 %320, %v12
  %v322 = vpop.permute.xlu0 %321
  %324 = vset.pattern.permute.xlu0 6
  %325 = vperm.xlu0 %324, %v13
  %v326 = vpop.permute.xlu0 %325
  %v328 = vlaneseq
  %v329 = vshrl.u32 %v328, 7
  %v330 = vsub.s32 1, %v329
  %v331 = vrot.slane %v52, %v330
  %v332 = vlaneseq
  %v333 = vshrl.u32 %v332, 7
  %v334 = vsub.s32 1, %v333
  %v335 = vrot.slane %v51, %v334
  %v336 = vlaneseq
  %v337 = vshrl.u32 %v336, 7
  %v338 = vsub.s32 1, %v337
  %v339 = vrot.slane %v53, %v338
  %v340 = vmul.f32 %v318, %v331
  %v341 = vmul.f32 %v318, %v335
  %v342 = vmul.f32 %v318, %v339
  %v343 = vmul.f32 %v322, %v331
  %v344 = vmul.f32 %v322, %v335
  %v345 = vmul.f32 %v322, %v339
  %v346 = vmul.f32 %v326, %v331
  %v347 = vmul.f32 %v326, %v335
  %v348 = vmul.f32 %v326, %v339
  %v349 = vadd.f32 %v307, %v340
  %v350 = vadd.f32 %v308, %v341
  %v351 = vadd.f32 %v309, %v342
  %v352 = vadd.f32 %v310, %v343
  %v353 = vadd.f32 %v311, %v344
  %v354 = vadd.f32 %v312, %v345
  %v355 = vadd.f32 %v313, %v346
  %v356 = vadd.f32 %v314, %v347
  %v357 = vadd.f32 %v315, %v348
  %358 = vset.pattern.permute.xlu0 7
  %359 = vperm.xlu0 %358, %v11
  %v360 = vpop.permute.xlu0 %359
  %362 = vset.pattern.permute.xlu0 7
  %363 = vperm.xlu0 %362, %v12
  %v364 = vpop.permute.xlu0 %363
  %366 = vset.pattern.permute.xlu0 7
  %367 = vperm.xlu0 %366, %v13
  %v368 = vpop.permute.xlu0 %367
  %v370 = vlaneseq
  %v371 = vshrl.u32 %v370, 7
  %v372 = vsub.s32 1, %v371
  %v373 = vrot.slane %v62, %v372
  %v374 = vlaneseq
  %v375 = vshrl.u32 %v374, 7
  %v376 = vsub.s32 1, %v375
  %v377 = vrot.slane %v61, %v376
  %v378 = vlaneseq
  %v379 = vshrl.u32 %v378, 7
  %v380 = vsub.s32 1, %v379
  %v381 = vrot.slane %v63, %v380
  %v382 = vmul.f32 %v360, %v373
  %v383 = vmul.f32 %v360, %v377
  %v384 = vmul.f32 %v360, %v381
  %v385 = vmul.f32 %v364, %v373
  %v386 = vmul.f32 %v364, %v377
  %v387 = vmul.f32 %v364, %v381
  %v388 = vmul.f32 %v368, %v373
  %v389 = vmul.f32 %v368, %v377
  %v390 = vmul.f32 %v368, %v381
  %v391 = vadd.f32 %v349, %v382
  %v392 = vadd.f32 %v350, %v383
  %v393 = vadd.f32 %v351, %v384
  %v394 = vadd.f32 %v352, %v385
  %v395 = vadd.f32 %v353, %v386
  %v396 = vadd.f32 %v354, %v387
  %v397 = vadd.f32 %v355, %v388
  %v398 = vadd.f32 %v356, %v389
  %v399 = vadd.f32 %v357, %v390
  %400 = vset.pattern.permute.xlu0 8
  %401 = vperm.xlu0 %400, %v11
  %v402 = vpop.permute.xlu0 %401
  %404 = vset.pattern.permute.xlu0 8
  %405 = vperm.xlu0 %404, %v12
  %v406 = vpop.permute.xlu0 %405
  %408 = vset.pattern.permute.xlu0 8
  %409 = vperm.xlu0 %408, %v13
  %v410 = vpop.permute.xlu0 %409
  %v412 = vlaneseq
  %v413 = vshrl.u32 %v412, 7
  %v414 = vsub.s32 2, %v413
  %v415 = vrot.slane %v29, %v414
  %v416 = vlaneseq
  %v417 = vshrl.u32 %v416, 7
  %v418 = vsub.s32 2, %v417
  %v419 = vrot.slane %v30, %v418
  %v420 = vlaneseq
  %v421 = vshrl.u32 %v420, 7
  %v422 = vsub.s32 2, %v421
  %v423 = vrot.slane %v31, %v422
  %v424 = vmul.f32 %v402, %v415
  %v425 = vmul.f32 %v402, %v419
  %v426 = vmul.f32 %v402, %v423
  %v427 = vmul.f32 %v406, %v415
  %v428 = vmul.f32 %v406, %v419
  %v429 = vmul.f32 %v406, %v423
  %v430 = vmul.f32 %v410, %v415
  %v431 = vmul.f32 %v410, %v419
  %v432 = vmul.f32 %v410, %v423
  %v433 = vadd.f32 %v391, %v424
  %v434 = vadd.f32 %v392, %v425
  %v435 = vadd.f32 %v393, %v426
  %v436 = vadd.f32 %v394, %v427
  %v437 = vadd.f32 %v395, %v428
  %v438 = vadd.f32 %v396, %v429
  %v439 = vadd.f32 %v397, %v430
  %v440 = vadd.f32 %v398, %v431
  %v441 = vadd.f32 %v399, %v432
  %442 = vset.pattern.permute.xlu0 9
  %443 = vperm.xlu0 %442, %v11
  %v444 = vpop.permute.xlu0 %443
  %446 = vset.pattern.permute.xlu0 9
  %447 = vperm.xlu0 %446, %v12
  %v448 = vpop.permute.xlu0 %447
  %450 = vset.pattern.permute.xlu0 9
  %451 = vperm.xlu0 %450, %v13
  %v452 = vpop.permute.xlu0 %451
  %v454 = vlaneseq
  %v455 = vshrl.u32 %v454, 7
  %v456 = vsub.s32 2, %v455
  %v457 = vrot.slane %v42, %v456
  %v458 = vlaneseq
  %v459 = vshrl.u32 %v458, 7
  %v460 = vsub.s32 2, %v459
  %v461 = vrot.slane %v41, %v460
  %v462 = vlaneseq
  %v463 = vshrl.u32 %v462, 7
  %v464 = vsub.s32 2, %v463
  %v465 = vrot.slane %v43, %v464
  %v466 = vmul.f32 %v444, %v457
  %v467 = vmul.f32 %v444, %v461
  %v468 = vmul.f32 %v444, %v465
  %v469 = vmul.f32 %v448, %v457
  %v470 = vmul.f32 %v448, %v461
  %v471 = vmul.f32 %v448, %v465
  %v472 = vmul.f32 %v452, %v457
  %v473 = vmul.f32 %v452, %v461
  %v474 = vmul.f32 %v452, %v465
  %v475 = vadd.f32 %v433, %v466
  %v476 = vadd.f32 %v434, %v467
  %v477 = vadd.f32 %v435, %v468
  %v478 = vadd.f32 %v436, %v469
  %v479 = vadd.f32 %v437, %v470
  %v480 = vadd.f32 %v438, %v471
  %v481 = vadd.f32 %v439, %v472
  %v482 = vadd.f32 %v440, %v473
  %v483 = vadd.f32 %v441, %v474
  %484 = vset.pattern.permute.xlu0 10
  %485 = vperm.xlu0 %484, %v11
  %v486 = vpop.permute.xlu0 %485
  %488 = vset.pattern.permute.xlu0 10
  %489 = vperm.xlu0 %488, %v12
  %v490 = vpop.permute.xlu0 %489
  %492 = vset.pattern.permute.xlu0 10
  %493 = vperm.xlu0 %492, %v13
  %v494 = vpop.permute.xlu0 %493
  %v496 = vlaneseq
  %v497 = vshrl.u32 %v496, 7
  %v498 = vsub.s32 2, %v497
  %v499 = vrot.slane %v52, %v498
  %v500 = vlaneseq
  %v501 = vshrl.u32 %v500, 7
  %v502 = vsub.s32 2, %v501
  %v503 = vrot.slane %v51, %v502
  %v504 = vlaneseq
  %v505 = vshrl.u32 %v504, 7
  %v506 = vsub.s32 2, %v505
  %v507 = vrot.slane %v53, %v506
  %v508 = vmul.f32 %v486, %v499
  %v509 = vmul.f32 %v486, %v503
  %v510 = vmul.f32 %v486, %v507
  %v511 = vmul.f32 %v490, %v499
  %v512 = vmul.f32 %v490, %v503
  %v513 = vmul.f32 %v490, %v507
  %v514 = vmul.f32 %v494, %v499
  %v515 = vmul.f32 %v494, %v503
  %v516 = vmul.f32 %v494, %v507
  %v517 = vadd.f32 %v475, %v508
  %v518 = vadd.f32 %v476, %v509
  %v519 = vadd.f32 %v477, %v510
  %v520 = vadd.f32 %v478, %v511
  %v521 = vadd.f32 %v479, %v512
  %v522 = vadd.f32 %v480, %v513
  %v523 = vadd.f32 %v481, %v514
  %v524 = vadd.f32 %v482, %v515
  %v525 = vadd.f32 %v483, %v516
  %526 = vset.pattern.permute.xlu0 11
  %527 = vperm.xlu0 %526, %v11
  %v528 = vpop.permute.xlu0 %527
  %530 = vset.pattern.permute.xlu0 11
  %531 = vperm.xlu0 %530, %v12
  %v532 = vpop.permute.xlu0 %531
  %534 = vset.pattern.permute.xlu0 11
  %535 = vperm.xlu0 %534, %v13
  %v536 = vpop.permute.xlu0 %535
  %v538 = vlaneseq
  %v539 = vshrl.u32 %v538, 7
  %v540 = vsub.s32 2, %v539
  %v541 = vrot.slane %v62, %v540
  %v542 = vlaneseq
  %v543 = vshrl.u32 %v542, 7
  %v544 = vsub.s32 2, %v543
  %v545 = vrot.slane %v61, %v544
  %v546 = vlaneseq
  %v547 = vshrl.u32 %v546, 7
  %v548 = vsub.s32 2, %v547
  %v549 = vrot.slane %v63, %v548
  %v550 = vmul.f32 %v528, %v541
  %v551 = vmul.f32 %v528, %v545
  %v552 = vmul.f32 %v528, %v549
  %v553 = vmul.f32 %v532, %v541
  %v554 = vmul.f32 %v532, %v545
  %v555 = vmul.f32 %v532, %v549
  %v556 = vmul.f32 %v536, %v541
  %v557 = vmul.f32 %v536, %v545
  %v558 = vmul.f32 %v536, %v549
  %v559 = vadd.f32 %v517, %v550
  %v560 = vadd.f32 %v518, %v551
  %v561 = vadd.f32 %v519, %v552
  %v562 = vadd.f32 %v520, %v553
  %v563 = vadd.f32 %v521, %v554
  %v564 = vadd.f32 %v522, %v555
  %v565 = vadd.f32 %v523, %v556
  %v566 = vadd.f32 %v524, %v557
  %v567 = vadd.f32 %v525, %v558
  %v568 = vlaneseq
  %v569 = vshrl.u32 %v568, 7
  %v570 = vsub.s32 3, %v569
  %v571 = vrot.slane %v29, %v570
  %v572 = vlaneseq
  %v573 = vshrl.u32 %v572, 7
  %v574 = vsub.s32 3, %v573
  %v575 = vrot.slane %v30, %v574
  %v576 = vlaneseq
  %v577 = vshrl.u32 %v576, 7
  %v578 = vsub.s32 3, %v577
  %v579 = vrot.slane %v31, %v578
  %v580 = vmul.f32 %v66, %v571
  %v581 = vmul.f32 %v66, %v575
  %v582 = vmul.f32 %v66, %v579
  %v583 = vmul.f32 %v70, %v571
  %v584 = vmul.f32 %v70, %v575
  %v585 = vmul.f32 %v70, %v579
  %v586 = vmul.f32 %v74, %v571
  %v587 = vmul.f32 %v74, %v575
  %v588 = vmul.f32 %v74, %v579
  %v589 = vadd.f32 %v17, %v580
  %v590 = vadd.f32 %v17, %v581
  %v591 = vadd.f32 %v17, %v582
  %v592 = vadd.f32 %v22, %v583
  %v593 = vadd.f32 %v22, %v584
  %v594 = vadd.f32 %v22, %v585
  %v595 = vadd.f32 %v27, %v586
  %v596 = vadd.f32 %v27, %v587
  %v597 = vadd.f32 %v27, %v588
  %v598 = vlaneseq
  %v599 = vshrl.u32 %v598, 7
  %v600 = vsub.s32 3, %v599
  %v601 = vrot.slane %v42, %v600
  %v602 = vlaneseq
  %v603 = vshrl.u32 %v602, 7
  %v604 = vsub.s32 3, %v603
  %v605 = vrot.slane %v41, %v604
  %v606 = vlaneseq
  %v607 = vshrl.u32 %v606, 7
  %v608 = vsub.s32 3, %v607
  %v609 = vrot.slane %v43, %v608
  %v610 = vmul.f32 %v108, %v601
  %v611 = vmul.f32 %v108, %v605
  %v612 = vmul.f32 %v108, %v609
  %v613 = vmul.f32 %v112, %v601
  %v614 = vmul.f32 %v112, %v605
  %v615 = vmul.f32 %v112, %v609
  %v616 = vmul.f32 %v116, %v601
  %v617 = vmul.f32 %v116, %v605
  %v618 = vmul.f32 %v116, %v609
  %v619 = vadd.f32 %v589, %v610
  %v620 = vadd.f32 %v590, %v611
  %v621 = vadd.f32 %v591, %v612
  %v622 = vadd.f32 %v592, %v613
  %v623 = vadd.f32 %v593, %v614
  %v624 = vadd.f32 %v594, %v615
  %v625 = vadd.f32 %v595, %v616
  %v626 = vadd.f32 %v596, %v617
  %v627 = vadd.f32 %v597, %v618
  %v628 = vlaneseq
  %v629 = vshrl.u32 %v628, 7
  %v630 = vsub.s32 3, %v629
  %v631 = vrot.slane %v52, %v630
  %v632 = vlaneseq
  %v633 = vshrl.u32 %v632, 7
  %v634 = vsub.s32 3, %v633
  %v635 = vrot.slane %v51, %v634
  %v636 = vlaneseq
  %v637 = vshrl.u32 %v636, 7
  %v638 = vsub.s32 3, %v637
  %v639 = vrot.slane %v53, %v638
  %v640 = vmul.f32 %v150, %v631
  %v641 = vmul.f32 %v150, %v635
  %v642 = vmul.f32 %v150, %v639
  %v643 = vmul.f32 %v154, %v631
  %v644 = vmul.f32 %v154, %v635
  %v645 = vmul.f32 %v154, %v639
  %v646 = vmul.f32 %v158, %v631
  %v647 = vmul.f32 %v158, %v635
  %v648 = vmul.f32 %v158, %v639
  %v649 = vadd.f32 %v619, %v640
  %v650 = vadd.f32 %v620, %v641
  %v651 = vadd.f32 %v621, %v642
  %v652 = vadd.f32 %v622, %v643
  %v653 = vadd.f32 %v623, %v644
  %v654 = vadd.f32 %v624, %v645
  %v655 = vadd.f32 %v625, %v646
  %v656 = vadd.f32 %v626, %v647
  %v657 = vadd.f32 %v627, %v648
  %v658 = vlaneseq
  %v659 = vshrl.u32 %v658, 7
  %v660 = vsub.s32 3, %v659
  %v661 = vrot.slane %v62, %v660
  %v662 = vlaneseq
  %v663 = vshrl.u32 %v662, 7
  %v664 = vsub.s32 3, %v663
  %v665 = vrot.slane %v61, %v664
  %v666 = vlaneseq
  %v667 = vshrl.u32 %v666, 7
  %v668 = vsub.s32 3, %v667
  %v669 = vrot.slane %v63, %v668
  %v670 = vmul.f32 %v192, %v661
  %v671 = vmul.f32 %v192, %v665
  %v672 = vmul.f32 %v192, %v669
  %v673 = vmul.f32 %v196, %v661
  %v674 = vmul.f32 %v196, %v665
  %v675 = vmul.f32 %v196, %v669
  %v676 = vmul.f32 %v200, %v661
  %v677 = vmul.f32 %v200, %v665
  %v678 = vmul.f32 %v200, %v669
  %v679 = vadd.f32 %v649, %v670
  %v680 = vadd.f32 %v650, %v671
  %v681 = vadd.f32 %v651, %v672
  %v682 = vadd.f32 %v652, %v673
  %v683 = vadd.f32 %v653, %v674
  %v684 = vadd.f32 %v654, %v675
  %v685 = vadd.f32 %v655, %v676
  %v686 = vadd.f32 %v656, %v677
  %v687 = vadd.f32 %v657, %v678
  %v688 = vlaneseq
  %v689 = vshrl.u32 %v688, 7
  %v690 = vsub.s32 4, %v689
  %v691 = vrot.slane %v29, %v690
  %v692 = vlaneseq
  %v693 = vshrl.u32 %v692, 7
  %v694 = vsub.s32 4, %v693
  %v695 = vrot.slane %v30, %v694
  %v696 = vlaneseq
  %v697 = vshrl.u32 %v696, 7
  %v698 = vsub.s32 4, %v697
  %v699 = vrot.slane %v31, %v698
  %v700 = vmul.f32 %v234, %v691
  %v701 = vmul.f32 %v234, %v695
  %v702 = vmul.f32 %v234, %v699
  %v703 = vmul.f32 %v238, %v691
  %v704 = vmul.f32 %v238, %v695
  %v705 = vmul.f32 %v238, %v699
  %v706 = vmul.f32 %v242, %v691
  %v707 = vmul.f32 %v242, %v695
  %v708 = vmul.f32 %v242, %v699
  %v709 = vadd.f32 %v679, %v700
  %v710 = vadd.f32 %v680, %v701
  %v711 = vadd.f32 %v681, %v702
  %v712 = vadd.f32 %v682, %v703
  %v713 = vadd.f32 %v683, %v704
  %v714 = vadd.f32 %v684, %v705
  %v715 = vadd.f32 %v685, %v706
  %v716 = vadd.f32 %v686, %v707
  %v717 = vadd.f32 %v687, %v708
  %v718 = vlaneseq
  %v719 = vshrl.u32 %v718, 7
  %v720 = vsub.s32 4, %v719
  %v721 = vrot.slane %v42, %v720
  %v722 = vlaneseq
  %v723 = vshrl.u32 %v722, 7
  %v724 = vsub.s32 4, %v723
  %v725 = vrot.slane %v41, %v724
  %v726 = vlaneseq
  %v727 = vshrl.u32 %v726, 7
  %v728 = vsub.s32 4, %v727
  %v729 = vrot.slane %v43, %v728
  %v730 = vmul.f32 %v276, %v721
  %v731 = vmul.f32 %v276, %v725
  %v732 = vmul.f32 %v276, %v729
  %v733 = vmul.f32 %v280, %v721
  %v734 = vmul.f32 %v280, %v725
  %v735 = vmul.f32 %v280, %v729
  %v736 = vmul.f32 %v284, %v721
  %v737 = vmul.f32 %v284, %v725
  %v738 = vmul.f32 %v284, %v729
  %v739 = vadd.f32 %v709, %v730
  %v740 = vadd.f32 %v710, %v731
  %v741 = vadd.f32 %v711, %v732
  %v742 = vadd.f32 %v712, %v733
  %v743 = vadd.f32 %v713, %v734
  %v744 = vadd.f32 %v714, %v735
  %v745 = vadd.f32 %v715, %v736
  %v746 = vadd.f32 %v716, %v737
  %v747 = vadd.f32 %v717, %v738
  %v748 = vlaneseq
  %v749 = vshrl.u32 %v748, 7
  %v750 = vsub.s32 4, %v749
  %v751 = vrot.slane %v52, %v750
  %v752 = vlaneseq
  %v753 = vshrl.u32 %v752, 7
  %v754 = vsub.s32 4, %v753
  %v755 = vrot.slane %v51, %v754
  %v756 = vlaneseq
  %v757 = vshrl.u32 %v756, 7
  %v758 = vsub.s32 4, %v757
  %v759 = vrot.slane %v53, %v758
  %v760 = vmul.f32 %v318, %v751
  %v761 = vmul.f32 %v318, %v755
  %v762 = vmul.f32 %v318, %v759
  %v763 = vmul.f32 %v322, %v751
  %v764 = vmul.f32 %v322, %v755
  %v765 = vmul.f32 %v322, %v759
  %v766 = vmul.f32 %v326, %v751
  %v767 = vmul.f32 %v326, %v755
  %v768 = vmul.f32 %v326, %v759
  %v769 = vadd.f32 %v739, %v760
  %v770 = vadd.f32 %v740, %v761
  %v771 = vadd.f32 %v741, %v762
  %v772 = vadd.f32 %v742, %v763
  %v773 = vadd.f32 %v743, %v764
  %v774 = vadd.f32 %v744, %v765
  %v775 = vadd.f32 %v745, %v766
  %v776 = vadd.f32 %v746, %v767
  %v777 = vadd.f32 %v747, %v768
  %v778 = vlaneseq
  %v779 = vshrl.u32 %v778, 7
  %v780 = vsub.s32 4, %v779
  %v781 = vrot.slane %v62, %v780
  %v782 = vlaneseq
  %v783 = vshrl.u32 %v782, 7
  %v784 = vsub.s32 4, %v783
  %v785 = vrot.slane %v61, %v784
  %v786 = vlaneseq
  %v787 = vshrl.u32 %v786, 7
  %v788 = vsub.s32 4, %v787
  %v789 = vrot.slane %v63, %v788
  %v790 = vmul.f32 %v360, %v781
  %v791 = vmul.f32 %v360, %v785
  %v792 = vmul.f32 %v360, %v789
  %v793 = vmul.f32 %v364, %v781
  %v794 = vmul.f32 %v364, %v785
  %v795 = vmul.f32 %v364, %v789
  %v796 = vmul.f32 %v368, %v781
  %v797 = vmul.f32 %v368, %v785
  %v798 = vmul.f32 %v368, %v789
  %v799 = vadd.f32 %v769, %v790
  %v800 = vadd.f32 %v770, %v791
  %v801 = vadd.f32 %v771, %v792
  %v802 = vadd.f32 %v772, %v793
  %v803 = vadd.f32 %v773, %v794
  %v804 = vadd.f32 %v774, %v795
  %v805 = vadd.f32 %v775, %v796
  %v806 = vadd.f32 %v776, %v797
  %v807 = vadd.f32 %v777, %v798
  %v808 = vlaneseq
  %v809 = vshrl.u32 %v808, 7
  %v810 = vsub.s32 5, %v809
  %v811 = vrot.slane %v29, %v810
  %v812 = vlaneseq
  %v813 = vshrl.u32 %v812, 7
  %v814 = vsub.s32 5, %v813
  %v815 = vrot.slane %v30, %v814
  %v816 = vlaneseq
  %v817 = vshrl.u32 %v816, 7
  %v818 = vsub.s32 5, %v817
  %v819 = vrot.slane %v31, %v818
  %v820 = vmul.f32 %v402, %v811
  %v821 = vmul.f32 %v402, %v815
  %v822 = vmul.f32 %v402, %v819
  %v823 = vmul.f32 %v406, %v811
  %v824 = vmul.f32 %v406, %v815
  %v825 = vmul.f32 %v406, %v819
  %v826 = vmul.f32 %v410, %v811
  %v827 = vmul.f32 %v410, %v815
  %v828 = vmul.f32 %v410, %v819
  %v829 = vadd.f32 %v799, %v820
  %v830 = vadd.f32 %v800, %v821
  %v831 = vadd.f32 %v801, %v822
  %v832 = vadd.f32 %v802, %v823
  %v833 = vadd.f32 %v803, %v824
  %v834 = vadd.f32 %v804, %v825
  %v835 = vadd.f32 %v805, %v826
  %v836 = vadd.f32 %v806, %v827
  %v837 = vadd.f32 %v807, %v828
  %v838 = vlaneseq
  %v839 = vshrl.u32 %v838, 7
  %v840 = vsub.s32 5, %v839
  %v841 = vrot.slane %v42, %v840
  %v842 = vlaneseq
  %v843 = vshrl.u32 %v842, 7
  %v844 = vsub.s32 5, %v843
  %v845 = vrot.slane %v41, %v844
  %v846 = vlaneseq
  %v847 = vshrl.u32 %v846, 7
  %v848 = vsub.s32 5, %v847
  %v849 = vrot.slane %v43, %v848
  %v850 = vmul.f32 %v444, %v841
  %v851 = vmul.f32 %v444, %v845
  %v852 = vmul.f32 %v444, %v849
  %v853 = vmul.f32 %v448, %v841
  %v854 = vmul.f32 %v448, %v845
  %v855 = vmul.f32 %v448, %v849
  %v856 = vmul.f32 %v452, %v841
  %v857 = vmul.f32 %v452, %v845
  %v858 = vmul.f32 %v452, %v849
  %v859 = vadd.f32 %v829, %v850
  %v860 = vadd.f32 %v830, %v851
  %v861 = vadd.f32 %v831, %v852
  %v862 = vadd.f32 %v832, %v853
  %v863 = vadd.f32 %v833, %v854
  %v864 = vadd.f32 %v834, %v855
  %v865 = vadd.f32 %v835, %v856
  %v866 = vadd.f32 %v836, %v857
  %v867 = vadd.f32 %v837, %v858
  %v868 = vlaneseq
  %v869 = vshrl.u32 %v868, 7
  %v870 = vsub.s32 5, %v869
  %v871 = vrot.slane %v52, %v870
  %v872 = vlaneseq
  %v873 = vshrl.u32 %v872, 7
  %v874 = vsub.s32 5, %v873
  %v875 = vrot.slane %v51, %v874
  %v876 = vlaneseq
  %v877 = vshrl.u32 %v876, 7
  %v878 = vsub.s32 5, %v877
  %v879 = vrot.slane %v53, %v878
  %v880 = vmul.f32 %v486, %v871
  %v881 = vmul.f32 %v486, %v875
  %v882 = vmul.f32 %v486, %v879
  %v883 = vmul.f32 %v490, %v871
  %v884 = vmul.f32 %v490, %v875
  %v885 = vmul.f32 %v490, %v879
  %v886 = vmul.f32 %v494, %v871
  %v887 = vmul.f32 %v494, %v875
  %v888 = vmul.f32 %v494, %v879
  %v889 = vadd.f32 %v859, %v880
  %v890 = vadd.f32 %v860, %v881
  %v891 = vadd.f32 %v861, %v882
  %v892 = vadd.f32 %v862, %v883
  %v893 = vadd.f32 %v863, %v884
  %v894 = vadd.f32 %v864, %v885
  %v895 = vadd.f32 %v865, %v886
  %v896 = vadd.f32 %v866, %v887
  %v897 = vadd.f32 %v867, %v888
  %v898 = vlaneseq
  %v899 = vshrl.u32 %v898, 7
  %v900 = vsub.s32 5, %v899
  %v901 = vrot.slane %v62, %v900
  %v902 = vlaneseq
  %v903 = vshrl.u32 %v902, 7
  %v904 = vsub.s32 5, %v903
  %v905 = vrot.slane %v61, %v904
  %v906 = vlaneseq
  %v907 = vshrl.u32 %v906, 7
  %v908 = vsub.s32 5, %v907
  %v909 = vrot.slane %v63, %v908
  %v910 = vmul.f32 %v528, %v901
  %v911 = vmul.f32 %v528, %v905
  %v912 = vmul.f32 %v528, %v909
  %v913 = vmul.f32 %v532, %v901
  %v914 = vmul.f32 %v532, %v905
  %v915 = vmul.f32 %v532, %v909
  %v916 = vmul.f32 %v536, %v901
  %v917 = vmul.f32 %v536, %v905
  %v918 = vmul.f32 %v536, %v909
  %v919 = vadd.f32 %v889, %v910
  %v920 = vadd.f32 %v890, %v911
  %v921 = vadd.f32 %v891, %v912
  %v922 = vadd.f32 %v892, %v913
  %v923 = vadd.f32 %v893, %v914
  %v924 = vadd.f32 %v894, %v915
  %v925 = vadd.f32 %v895, %v916
  %v926 = vadd.f32 %v896, %v917
  %v927 = vadd.f32 %v897, %v918
  %vm937 = vcmask 1043456
  %v938 = vrot.slane %v919, 4
  %v939 = vrot.slane %v920, 4
  %v940 = vrot.slane %v921, 4
  %v941 = vrot.slane %v922, 4
  %v942 = vsel %vm937, %v938, %v941
  %v943 = vrot.slane %v923, 4
  %v944 = vsel %vm937, %v939, %v943
  %v945 = vrot.slane %v924, 4
  %v946 = vsel %vm937, %v940, %v945
  %v947 = vrot.slane %v925, 4
  %v948 = vsel %vm937, %v941, %v947
  %v949 = vrot.slane %v926, 4
  %v950 = vsel %vm937, %v943, %v949
  %v951 = vrot.slane %v927, 4
  %v952 = vsel %vm937, %v945, %v951
  %v962 = vsel %vm937, %v565, %v938
  %v963 = vsel %vm937, %v566, %v939
  %v964 = vsel %vm937, %v567, %v940
  %v965 = vmax.f32 %v559, 0.05
  %v966 = vmax.f32 %v560, 0.05
  %v967 = vmax.f32 %v561, 0.05
  %v968 = vmax.f32 %v562, 0.05
  %v969 = vmax.f32 %v563, 0.05
  %v970 = vmax.f32 %v564, 0.05
  %v971 = vmax.f32 %v962, 0.05
  %v972 = vmax.f32 %v963, 0.05
  %v973 = vmax.f32 %v964, 0.05
  %v974 = vmax.f32 %v942, 0.05
  %v975 = vmax.f32 %v944, 0.05
  %v976 = vmax.f32 %v946, 0.05
  %v977 = vmax.f32 %v948, 0.05
  %v978 = vmax.f32 %v950, 0.05
  %v979 = vmax.f32 %v952, 0.05
  %v980 = vmin.f32 %v965, 0.08
  %v981 = vmin.f32 %v966, 0.08
  %v982 = vmin.f32 %v967, 0.08
  %v983 = vmin.f32 %v968, 0.08
  %v984 = vmin.f32 %v969, 0.08
  %v985 = vmin.f32 %v970, 0.08
  %v986 = vmin.f32 %v971, 0.08
  %v987 = vmin.f32 %v972, 0.08
  %v988 = vmin.f32 %v973, 0.08
  %v989 = vmin.f32 %v974, 0.08
  %v990 = vmin.f32 %v975, 0.08
  %v991 = vmin.f32 %v976, 0.08
  %v992 = vmin.f32 %v977, 0.08
  %v993 = vmin.f32 %v978, 0.08
  %v994 = vmin.f32 %v979, 0.08
  %995 = vst [vmem:[%s2] sm:$0xff] %v980
  %996 = vst [vmem:[%s2 + $0x8] sm:$0xff] %v981
  %997 = vst [vmem:[%s2 + $0x10] sm:$0xff] %v982
  %998 = vst [vmem:[%s2 + $0x18] sm:$0xff] %v983
  %999 = vst [vmem:[%s2 + $0x20] sm:$0xff] %v984
  %1000 = vst [vmem:[%s2 + $0x28] sm:$0xff] %v985
  %1001 = vst [vmem:[%s2 + $0x30] sm:$0xff] %v986
  %1002 = vst [vmem:[%s2 + $0x38] sm:$0xff] %v987
  %1003 = vst [vmem:[%s2 + $0x40] sm:$0xff] %v988
  %1004 = vst [vmem:[%s2 + $0x48] sm:$0xff] %v989
  %1005 = vst [vmem:[%s2 + $0x50] sm:$0xff] %v990
  %1006 = vst [vmem:[%s2 + $0x58] sm:$0xff] %v991
  %1007 = vst [vmem:[%s2 + $0x60] sm:$0xff] %v992
  %1008 = vst [vmem:[%s2 + $0x68] sm:$0xff] %v993
  %1009 = vst [vmem:[%s2 + $0x70] sm:$0xff] %v994
  // Predicated region
  $region10: #{conv_transpose2d_clamp.1} parent=0 // pred_check
    _
  $region11: #{conv_transpose2d_clamp.1} parent=0 // pred_check_branch
    %1011 = sbr.rel (0) target = $region13
  $region12: #{conv_transpose2d_clamp.1} parent=0 // pred_region
    _
  $region13: #{conv_transpose2d_clamp.1} parent=0 // pred_fallthru
    _
  // Predicated region
  $region14: #{conv_transpose2d_clamp.1} parent=0 // pred_check
    _
  $region15: #{conv_transpose2d_clamp.1} parent=0 // pred_check_branch
    %1013 = sbr.rel (0) target = $region17
  $region16: #{conv_transpose2d_clamp.1} parent=0 // pred_region
    _
  $region17: #{conv_transpose2d_clamp.1} parent=0 // pred_fallthru
    _

</llo_original>
